<compile_context>
chip_gen: v6e
topology: v6e:2x2x1
jax: 0.10.0
libtpu: 0.0.40
codegen_flags: <defaults>
</compile_context>

<pallas_src>
import jax
import jax.numpy as jnp
from jax.experimental import pallas as pl
from jax.experimental.pallas import tpu as pltpu


def _round_up(x, m):
    return ((x + m - 1) // m) * m


def _round_down(x, m):
    return (x // m) * m


def _tpu_info():
    """Returns (vmem_capacity_bytes, tensorcores_per_chip, mxu_m) with fallbacks."""
    kind = ""
    try:
        kind = jax.devices()[0].device_kind.lower()
    except Exception:
        pass
    is_v5e = ("v5e" in kind) or ("v5 lite" in kind) or ("v5lite" in kind)
    is_v6e = "v6" in kind
    is_v7 = "v7" in kind

    vmem = None
    try:
        info = pltpu.get_tpu_info()
        vmem = getattr(info, "vmem_capacity_bytes", None)
    except Exception:
        vmem = None
    if vmem is None:
        vmem = (64 << 20) if is_v7 else (128 << 20)

    # v5e / v6e have a single TensorCore per chip -> a >=2-step 'parallel' grid
    # is pure overhead there; only multi-TC parts benefit from the split.
    num_tc = 1 if (is_v5e or is_v6e) else 2
    mxu_m = 256 if (is_v6e or is_v7) else 128
    return int(vmem), num_tc, mxu_m


def _make_kernel(use_scratch):
    """Fused 3-layer MLP body; optional VMEM staging of the two intermediates."""
    if use_scratch:
        def kernel(x_ref, w1_ref, b1_ref, w2_ref, b2_ref, w3_ref, b3_ref,
                   o_ref, h1_ref, h2_ref):
            # Cast x on the fly (VPU slot idle under MXU work) instead of a
            # separate wrapper-side cast pass over HBM.
            x = x_ref[...].astype(w1_ref.dtype)
            h1 = jnp.dot(x, w1_ref[...], preferred_element_type=jnp.float32)
            # f32 bias + ReLU epilogue, cast fused into the scratch store.
            h1_ref[...] = jnp.maximum(h1 + b1_ref[...], 0.0).astype(h1_ref.dtype)

            h2 = jnp.dot(h1_ref[...], w2_ref[...], preferred_element_type=jnp.float32)
            h2_ref[...] = jnp.maximum(h2 + b2_ref[...], 0.0).astype(h2_ref.dtype)

            out = jnp.dot(h2_ref[...], w3_ref[...], preferred_element_type=jnp.float32)
            o_ref[...] = (out + b3_ref[...]).astype(o_ref.dtype)
    else:
        def kernel(x_ref, w1_ref, b1_ref, w2_ref, b2_ref, w3_ref, b3_ref, o_ref):
            x = x_ref[...].astype(w1_ref.dtype)
            h1 = jnp.dot(x, w1_ref[...], preferred_element_type=jnp.float32)
            a1 = jnp.maximum(h1 + b1_ref[...], 0.0).astype(w2_ref.dtype)

            h2 = jnp.dot(a1, w2_ref[...], preferred_element_type=jnp.float32)
            a2 = jnp.maximum(h2 + b2_ref[...], 0.0).astype(w3_ref.dtype)

            out = jnp.dot(a2, w3_ref[...], preferred_element_type=jnp.float32)
            o_ref[...] = (out + b3_ref[...]).astype(o_ref.dtype)
    return kernel


def _resident_spec(shape):
    """BlockSpec for a weight/bias that is fully resident (constant index_map).

    Single-buffered: constant-index inputs are fetched once and reused, so the
    default second pipeline buffer would only waste VMEM.
    """
    index_map = lambda i: (0,) * len(shape)
    buffered = getattr(pl, "Buffered", None)
    if buffered is not None:
        try:
            return pl.BlockSpec(shape, index_map, pipeline_mode=buffered(1))
        except TypeError:  # very old jax without pipeline_mode kwarg
            pass
    return pl.BlockSpec(shape, index_map)


def mlp_forward(x, params, *, tb=None, mxu_dtype=None):
    """x: (B, input_size) f32.  params: dict of w1,b1,w2,b2,w3,b3.

    mxu_dtype: optional MXU operand dtype (e.g. jnp.bfloat16).  Accumulation
    and the bias/ReLU epilogue stay in f32; the bf16 path loses mantissa in
    all three layers (documented, loose-tolerance only).
    """
    w1, b1, w2, b2, w3, b3 = (params[k] for k in ("w1", "b1", "w2", "b2", "w3", "b3"))
    B, d_in = x.shape
    h1_f, h2_f, d_out = w1.shape[1], w2.shape[1], w3.shape[1]
    out_dtype = x.dtype

    vmem_cap, num_tc, mxu_m = _tpu_info()
    # Headroom below physical VMEM: tight on 64 MiB/TC v7x, ~85% on 128 MiB parts.
    if vmem_cap <= (64 << 20):
        vmem_budget = vmem_cap - (8 << 20)       # ~56 MiB on v7x
    else:
        vmem_budget = int(vmem_cap * 0.85)       # ~108 MiB on v5e / v6e

    # ---- Lane-pad every feature dim to a multiple of 128 (exact no-op math). ----
    d_in_p, h1_p, h2_p, d_out_p = (_round_up(d, 128) for d in (d_in, h1_f, h2_f, d_out))

    def pad2(a, rows, cols):
        return jnp.pad(a, ((0, rows - a.shape[0]), (0, cols - a.shape[1])))

    mxu_dt = jnp.dtype(mxu_dtype) if mxu_dtype is not None else jnp.dtype(x.dtype)

    def weight_bytes(dt):
        return (d_in_p * h1_p + h1_p * h2_p + h2_p * d_out_p) * jnp.dtype(dt).itemsize

    # If f32-resident weights alone would blow the per-TC budget, fall back to
    # bf16 resident weights (halves residency, f32 accumulation kept).
    # TODO(synk): true K/N weight tiling (emit_pipeline over hidden dims with an
    # f32 accumulator) for models whose bf16 weights still exceed per-TC VMEM.
    min_resident = weight_bytes(mxu_dt) + (h1_p + h2_p + d_out_p) * 4
    if mxu_dt == jnp.float32 and min_resident > int(vmem_budget * 0.75):
        mxu_dt = jnp.dtype(jnp.bfloat16)

    # ---- Batch tile policy (generation aware). ----
    tb_target = 512 if tb is None else int(tb)
    if num_tc >= 2 and B >= 2 * 256:
        # Multi-TC part and each half is still a full-width MXU tile: cap so the
        # 'parallel' batch axis has >= num_tc grid steps (megacore sharding).
        tb_target = min(tb_target, _round_up(pl.cdiv(B, num_tc), mxu_m))
    tb_eff = min(tb_target, _round_up(B, 8))
    tb_eff = _round_down(tb_eff, mxu_m) if tb_eff >= mxu_m else _round_up(tb_eff, 8)
    tb_eff = max(8, tb_eff)

    def footprint(t):
        w = weight_bytes(mxu_dt)                                 # single-buffered
        bias = (h1_p + h2_p + d_out_p) * 4                       # f32 biases
        x_t = 2 * t * d_in_p * jnp.dtype(x.dtype).itemsize       # double-buffered tile
        o_t = 2 * t * d_out_p * jnp.dtype(out_dtype).itemsize
        scr = t * (h1_p + h2_p) * mxu_dt.itemsize                # staged intermediates
        return w + bias + x_t + o_t + scr

    # Shrink the batch tile until the resident footprint fits the budget.
    while tb_eff > 8 and footprint(tb_eff) > vmem_budget:
        nxt = tb_eff // 2
        tb_eff = _round_down(nxt, mxu_m) if nxt >= mxu_m else max(8, _round_up(nxt, 8))
    tb_eff = max(8, tb_eff)

    grid = (pl.cdiv(B, tb_eff),)

    # Stage intermediates in VMEM scratch only when they are too big to live in
    # vregs (> ~64 KiB per buffer); otherwise keep them as SSA values and skip
    # the vst+vld round trip (important on v5e's single store slot).
    per_inter_bytes = tb_eff * max(h1_p, h2_p) * mxu_dt.itemsize
    use_scratch = per_inter_bytes > (64 << 10)

    # ---- Pad (and cast weights only) in the wrapper; x stays in its own dtype. ----
    x_p = pad2(x, B, d_in_p)
    w1_p = pad2(w1, d_in_p, h1_p).astype(mxu_dt)
    w2_p = pad2(w2, h1_p, h2_p).astype(mxu_dt)
    w3_p = pad2(w3, h2_p, d_out_p).astype(mxu_dt)
    b1_p = pad2(b1, 1, h1_p).astype(jnp.float32)
    b2_p = pad2(b2, 1, h2_p).astype(jnp.float32)
    b3_p = pad2(b3, 1, d_out_p).astype(jnp.float32)

    needed = footprint(tb_eff)
    vmem_limit = int(min(vmem_budget, max(32 << 20, int(needed * 1.3) + (2 << 20))))

    scratch_shapes = (
        [pltpu.VMEM((tb_eff, h1_p), mxu_dt), pltpu.VMEM((tb_eff, h2_p), mxu_dt)]
        if use_scratch else []
    )

    # TODO(synk): on v5e, if profiling shows this kernel MXU-bound, split tb into
    # two statically-unrolled sub-tiles to overlap the MRF drain across layers.

    out_p = pl.pallas_call(
        _make_kernel(use_scratch),
        out_shape=jax.ShapeDtypeStruct((B, d_out_p), out_dtype),
        grid_spec=pltpu.PrefetchScalarGridSpec(
            num_scalar_prefetch=0,
            grid=grid,
            in_specs=[
                pl.BlockSpec((tb_eff, d_in_p), lambda i: (i, 0)),  # x tile over batch
                _resident_spec((d_in_p, h1_p)),                    # w1 (resident)
                _resident_spec((1, h1_p)),                         # b1
                _resident_spec((h1_p, h2_p)),                      # w2
                _resident_spec((1, h2_p)),                         # b2
                _resident_spec((h2_p, d_out_p)),                   # w3
                _resident_spec((1, d_out_p)),                      # b3
            ],
            out_specs=pl.BlockSpec((tb_eff, d_out_p), lambda i: (i, 0)),
            scratch_shapes=scratch_shapes,
        ),
        compiler_params=pltpu.CompilerParams(
            dimension_semantics=("parallel",),
            vmem_limit_bytes=vmem_limit,
        ),
    )(x_p, w1_p, b1_p, w2_p, b2_p, w3_p, b3_p)

    return out_p[:, :d_out] if d_out_p != d_out else out_p


def init_params(key, input_size, hidden_size_1, hidden_size_2, output_size):
    """Matches nn.init.uniform_(-0.5, 0.5) on every Linear weight and bias."""
    ks = jax.random.split(key, 6)
    u = lambda k, shape: jax.random.uniform(k, shape, jnp.float32, -0.5, 0.5)
    return {
        "w1": u(ks[0], (input_size, hidden_size_1)),
        "b1": u(ks[1], (1, hidden_size_1)),
        "w2": u(ks[2], (hidden_size_1, hidden_size_2)),
        "b2": u(ks[3], (1, hidden_size_2)),
        "w3": u(ks[4], (hidden_size_2, output_size)),
        "b3": u(ks[5], (1, output_size)),
    }


def mlp_reference(x, p):
    h1 = jnp.maximum(x @ p["w1"] + p["b1"], 0.0)
    h2 = jnp.maximum(h1 @ p["w2"] + p["b2"], 0.0)
    return h2 @ p["w3"] + p["b3"]


if __name__ == "__main__":
    key = jax.random.PRNGKey(0)
    k_x, k_x2, k_p = jax.random.split(key, 3)

    input_size, hidden_size_1, hidden_size_2, output_size = 32, 64, 64, 16
    params = init_params(k_p, input_size, hidden_size_1, hidden_size_2, output_size)

    # --- Small batch (single tile, SSA-intermediate path), f32 exact check. ---
    batch = 32
    x = jax.random.normal(k_x, (batch, input_size), jnp.float32)
    ref = mlp_reference(x, params)

    out = jax.block_until_ready(mlp_forward(x, params))
    assert out.shape == (batch, output_size), out.shape
    assert jnp.allclose(out, ref, atol=1e-4, rtol=1e-4), "f32 mismatch vs reference"

    # --- bf16 MXU-operand path (loose tolerance; mantissa lost in all layers). ---
    out_bf16 = jax.block_until_ready(mlp_forward(x, params, mxu_dtype=jnp.bfloat16))
    assert out_bf16.shape == (batch, output_size), out_bf16.shape
    assert jnp.allclose(out_bf16, ref, atol=2e-1, rtol=1e-1), "bf16 mismatch vs reference"

    # --- Larger, non-tile-multiple batch (multi-step grid, masked last block). ---
    batch2 = 272
    x2 = jax.random.normal(k_x2, (batch2, input_size), jnp.float32)
    ref2 = mlp_reference(x2, params)
    out2 = jax.block_until_ready(mlp_forward(x2, params))
    assert out2.shape == (batch2, output_size), out2.shape
    assert jnp.allclose(out2, ref2, atol=1e-4, rtol=1e-4), "multi-tile f32 mismatch"

    print("KERNEL_OK")
</pallas_src>

<mosaic_0001>
module attributes {stable_mosaic.version = 11 : i64} {
  func.func @kernel(%arg0: i32, %arg1: memref<32x128xf32, #tpu.memory_space<vmem>>, %arg2: memref<128x128xf32, #tpu.memory_space<vmem>>, %arg3: memref<1x128xf32, #tpu.memory_space<vmem>>, %arg4: memref<128x128xf32, #tpu.memory_space<vmem>>, %arg5: memref<1x128xf32, #tpu.memory_space<vmem>>, %arg6: memref<128x128xf32, #tpu.memory_space<vmem>>, %arg7: memref<1x128xf32, #tpu.memory_space<vmem>>, %arg8: memref<32x128xf32, #tpu.memory_space<vmem>>) attributes {dimension_semantics = [#tpu.dimension_semantics<parallel>], iteration_bounds = array<i64: 1>, scalar_prefetch = 0 : i64, scratch_operands = 0 : i64, tpu.core_type = #tpu.core_type<tc>, window_params = [{transform_indices = @transform_0, window_bounds = array<i64: 32, 128>}, {pipeline_mode = #tpu.pipeline_mode<synchronous>, transform_indices = @transform_1, window_bounds = array<i64: 128, 128>}, {pipeline_mode = #tpu.pipeline_mode<synchronous>, transform_indices = @transform_2, window_bounds = array<i64: 1, 128>}, {pipeline_mode = #tpu.pipeline_mode<synchronous>, transform_indices = @transform_3, window_bounds = array<i64: 128, 128>}, {pipeline_mode = #tpu.pipeline_mode<synchronous>, transform_indices = @transform_4, window_bounds = array<i64: 1, 128>}, {pipeline_mode = #tpu.pipeline_mode<synchronous>, transform_indices = @transform_5, window_bounds = array<i64: 128, 128>}, {pipeline_mode = #tpu.pipeline_mode<synchronous>, transform_indices = @transform_6, window_bounds = array<i64: 1, 128>}, {transform_indices = @transform_7, window_bounds = array<i64: 32, 128>}]} {
    %c0 = arith.constant 0 : index
    %c0_0 = arith.constant 0 : index
    %0 = vector.load %arg1[%c0, %c0_0] : memref<32x128xf32, #tpu.memory_space<vmem>>, vector<32x128xf32>
    %c0_1 = arith.constant 0 : index
    %c0_2 = arith.constant 0 : index
    %1 = vector.load %arg2[%c0_1, %c0_2] : memref<128x128xf32, #tpu.memory_space<vmem>>, vector<128x128xf32>
    %cst = arith.constant dense<0.000000e+00> : vector<32x128xf32>
    %2 = tpu.matmul %0, %1, %cst {dimension_numbers = #tpu.dot_dimension_numbers<[1], [0], [0], [1], [0, 0, 1, 1], [], []>} : vector<32x128xf32>, vector<128x128xf32>, vector<32x128xf32> -> vector<32x128xf32>
    %c0_3 = arith.constant 0 : index
    %c0_4 = arith.constant 0 : index
    %3 = vector.load %arg3[%c0_3, %c0_4] : memref<1x128xf32, #tpu.memory_space<vmem>>, vector<1x128xf32>
    %4 = vector.broadcast %3 : vector<1x128xf32> to vector<32x128xf32>
    %5 = arith.addf %2, %4 : vector<32x128xf32>
    %cst_5 = arith.constant 0.000000e+00 : f32
    %6 = vector.broadcast %cst_5 : f32 to vector<32x128xf32>
    %7 = arith.maximumf %5, %6 : vector<32x128xf32>
    %c0_6 = arith.constant 0 : index
    %c0_7 = arith.constant 0 : index
    %8 = vector.load %arg4[%c0_6, %c0_7] : memref<128x128xf32, #tpu.memory_space<vmem>>, vector<128x128xf32>
    %cst_8 = arith.constant dense<0.000000e+00> : vector<32x128xf32>
    %9 = tpu.matmul %7, %8, %cst_8 {dimension_numbers = #tpu.dot_dimension_numbers<[1], [0], [0], [1], [0, 0, 1, 1], [], []>} : vector<32x128xf32>, vector<128x128xf32>, vector<32x128xf32> -> vector<32x128xf32>
    %c0_9 = arith.constant 0 : index
    %c0_10 = arith.constant 0 : index
    %10 = vector.load %arg5[%c0_9, %c0_10] : memref<1x128xf32, #tpu.memory_space<vmem>>, vector<1x128xf32>
    %11 = vector.broadcast %10 : vector<1x128xf32> to vector<32x128xf32>
    %12 = arith.addf %9, %11 : vector<32x128xf32>
    %cst_11 = arith.constant 0.000000e+00 : f32
    %13 = vector.broadcast %cst_11 : f32 to vector<32x128xf32>
    %14 = arith.maximumf %12, %13 : vector<32x128xf32>
    %c0_12 = arith.constant 0 : index
    %c0_13 = arith.constant 0 : index
    %15 = vector.load %arg6[%c0_12, %c0_13] : memref<128x128xf32, #tpu.memory_space<vmem>>, vector<128x128xf32>
    %cst_14 = arith.constant dense<0.000000e+00> : vector<32x128xf32>
    %16 = tpu.matmul %14, %15, %cst_14 {dimension_numbers = #tpu.dot_dimension_numbers<[1], [0], [0], [1], [0, 0, 1, 1], [], []>} : vector<32x128xf32>, vector<128x128xf32>, vector<32x128xf32> -> vector<32x128xf32>
    %c0_15 = arith.constant 0 : index
    %c0_16 = arith.constant 0 : index
    %17 = vector.load %arg7[%c0_15, %c0_16] : memref<1x128xf32, #tpu.memory_space<vmem>>, vector<1x128xf32>
    %18 = vector.broadcast %17 : vector<1x128xf32> to vector<32x128xf32>
    %19 = arith.addf %16, %18 : vector<32x128xf32>
    %c0_17 = arith.constant 0 : index
    %c0_18 = arith.constant 0 : index
    %20 = vector.load %arg8[%c0_17, %c0_18] : memref<32x128xf32, #tpu.memory_space<vmem>>, vector<32x128xf32>
    tpu.vector_store %arg8[%c0_17, %c0_18], %19 {strides = array<i32>} : memref<32x128xf32, #tpu.memory_space<vmem>>, vector<32x128xf32>,
    return
  }
  func.func @transform_0(%arg0: i32) -> (i32, i32) {
    %c0_i32 = arith.constant 0 : i32
    %c0_i32_0 = arith.constant 0 : i32
    return %arg0, %c0_i32 : i32, i32
  }
  func.func @transform_1(%arg0: i32) -> (i32, i32) {
    %c0_i32 = arith.constant 0 : i32
    %c0_i32_0 = arith.constant 0 : i32
    %c0_i32_1 = arith.constant 0 : i32
    return %c0_i32, %c0_i32_0 : i32, i32
  }
  func.func @transform_2(%arg0: i32) -> (i32, i32) {
    %c0_i32 = arith.constant 0 : i32
    %c0_i32_0 = arith.constant 0 : i32
    %c0_i32_1 = arith.constant 0 : i32
    return %c0_i32, %c0_i32_0 : i32, i32
  }
  func.func @transform_3(%arg0: i32) -> (i32, i32) {
    %c0_i32 = arith.constant 0 : i32
    %c0_i32_0 = arith.constant 0 : i32
    %c0_i32_1 = arith.constant 0 : i32
    return %c0_i32, %c0_i32_0 : i32, i32
  }
  func.func @transform_4(%arg0: i32) -> (i32, i32) {
    %c0_i32 = arith.constant 0 : i32
    %c0_i32_0 = arith.constant 0 : i32
    %c0_i32_1 = arith.constant 0 : i32
    return %c0_i32, %c0_i32_0 : i32, i32
  }
  func.func @transform_5(%arg0: i32) -> (i32, i32) {
    %c0_i32 = arith.constant 0 : i32
    %c0_i32_0 = arith.constant 0 : i32
    %c0_i32_1 = arith.constant 0 : i32
    return %c0_i32, %c0_i32_0 : i32, i32
  }
  func.func @transform_6(%arg0: i32) -> (i32, i32) {
    %c0_i32 = arith.constant 0 : i32
    %c0_i32_0 = arith.constant 0 : i32
    %c0_i32_1 = arith.constant 0 : i32
    return %c0_i32, %c0_i32_0 : i32, i32
  }
  func.func @transform_7(%arg0: i32) -> (i32, i32) {
    %c0_i32 = arith.constant 0 : i32
    %c0_i32_0 = arith.constant 0 : i32
    return %arg0, %c0_i32 : i32, i32
  }
}

</mosaic_0001>

<llo_original>
// kernel: tpu_custom_call.1
$region0: #{tpu_custom_call.1}
  #allocation0 [shape = 'u32[]', space=smem, size = 0x4, offset = 0x4, fixed_abs, tag = 'smem constant byte address 0x4 - core index']
  #allocation1 [shape = 'u32[144,128]{1,0:T(1,128)}', space=vmem, size = 0x12000, scoped, tag = 'internal scratch']
  %s0 = inlined_call_operand.hbm [shape: f32[32,128], index: 0, kind: input, shape index: {}]
  %s1 = inlined_call_operand.hbm [shape: f32[128,128], index: 1, kind: input, shape index: {}]
  %s2 = inlined_call_operand.vmem [shape: f32[1,128], index: 2, kind: input, shape index: {}]
  %s3 = inlined_call_operand.hbm [shape: f32[128,128], index: 3, kind: input, shape index: {}]
  %s4 = inlined_call_operand.vmem [shape: f32[1,128], index: 4, kind: input, shape index: {}]
  %s5 = inlined_call_operand.hbm [shape: f32[128,128], index: 5, kind: input, shape index: {}]
  %s6 = inlined_call_operand.vmem [shape: f32[1,128], index: 6, kind: input, shape index: {}]
  %s7 = inlined_call_operand.hbm [shape: f32[32,128], index: 7, kind: output, shape index: {}]
  %s8 = sld [smem:[#allocation0]]
  $region54: #{tpu_custom_call.1} parent=0
    _
  %s10 = ssub.s32 1, %s8
  %s11 = scalar_select 0, %s10, %s8
  $region1: #{tpu_custom_call.1} parent=0
    #allocation2 [shape = 'u8[16384]{0}', space=vmem, size = 0x4000, scoped, tag = 'input window, operand 0, single buffered']
    #allocation3 [shape = 's32[1]{0}', space=sflag, size = 0x4, scoped, tag = 'scoped memory for tpu_custom_call.1']
    #allocation4 [shape = 's32[1]{0}', space=sflag, size = 0x4, scoped, tag = 'scoped memory for tpu_custom_call.1']
    #allocation5 [shape = 'u8[65536]{0}', space=vmem, size = 0x10000, scoped, tag = 'input window, operand 1, single buffered']
    #allocation6 [shape = 's32[1]{0}', space=sflag, size = 0x4, scoped, tag = 'scoped memory for tpu_custom_call.1']
    #allocation7 [shape = 'u8[65536]{0}', space=vmem, size = 0x10000, scoped, tag = 'input window, operand 3, single buffered']
    #allocation8 [shape = 'u8[65536]{0}', space=vmem, size = 0x10000, scoped, tag = 'input window, operand 5, single buffered']
    #allocation9 [shape = 's32[1]{0}', space=sflag, size = 0x4, scoped, tag = 'scoped memory for tpu_custom_call.1']
    #allocation10 [shape = 'u8[16384]{0}', space=vmem, size = 0x4000, scoped, tag = 'output window, operand 0, single buffered']
    %12 = vsyncpa [#allocation3], 0
    %13 = vsyncpa [#allocation6], 0
    %14 = vsyncpa [#allocation9], 0
    %15 = vsyncpa [#allocation4], 0
    // Predicated region
    $region2: #{tpu_custom_call.1} parent=1 // pred_check
      _
    $region3: #{tpu_custom_call.1} parent=1 // pred_check_branch
      %17 = sbr.rel (0) target = $region5
    $region4: #{tpu_custom_call.1} parent=1 // pred_region
      %s19 = ssub.s32 512, 512
      %20 = vsyncadd [#allocation3], %s19
      %s21 = sshll.u32 [#allocation2], 4
      %s22 = int_to_ptr.vmem [resolvable:$true] %s21
      %27 = dma.hbm_to_vmem [thread:$0]  %s0, 512, %s22, [#allocation3], 128, 128, 8
    $region5: #{tpu_custom_call.1} parent=1 // pred_fallthru
      _
    // Predicated region
    $region6: #{tpu_custom_call.1} parent=1 // pred_check
      _
    $region7: #{tpu_custom_call.1} parent=1 // pred_check_branch
      %29 = sbr.rel (0) target = $region9
    $region8: #{tpu_custom_call.1} parent=1 // pred_region
      %s31 = ssub.s32 2048, 2048
      %32 = vsyncadd [#allocation6], %s31
      %s33 = sshll.u32 [#allocation5], 4
      %s34 = int_to_ptr.vmem [resolvable:$true] %s33
      %39 = dma.hbm_to_vmem [thread:$0]  %s1, 2048, %s34, [#allocation6], 128, 128, 8
    $region9: #{tpu_custom_call.1} parent=1 // pred_fallthru
      _
    // Predicated region
    $region10: #{tpu_custom_call.1} parent=1 // pred_check
      _
    $region11: #{tpu_custom_call.1} parent=1 // pred_check_branch
      %41 = sbr.rel (0) target = $region13
    $region12: #{tpu_custom_call.1} parent=1 // pred_region
      _
    $region13: #{tpu_custom_call.1} parent=1 // pred_fallthru
      _
    // Predicated region
    $region14: #{tpu_custom_call.1} parent=1 // pred_check
      _
    $region15: #{tpu_custom_call.1} parent=1 // pred_check_branch
      %43 = sbr.rel (0) target = $region17
    $region16: #{tpu_custom_call.1} parent=1 // pred_region
      %s45 = ssub.s32 2048, 2048
      %46 = vsyncadd [#allocation6], %s45
      %s47 = sshll.u32 [#allocation7], 4
      %s48 = int_to_ptr.vmem [resolvable:$true] %s47
      %53 = dma.hbm_to_vmem [thread:$0]  %s3, 2048, %s48, [#allocation6], 128, 128, 8
    $region17: #{tpu_custom_call.1} parent=1 // pred_fallthru
      _
    // Predicated region
    $region18: #{tpu_custom_call.1} parent=1 // pred_check
      _
    $region19: #{tpu_custom_call.1} parent=1 // pred_check_branch
      %55 = sbr.rel (0) target = $region21
    $region20: #{tpu_custom_call.1} parent=1 // pred_region
      _
    $region21: #{tpu_custom_call.1} parent=1 // pred_fallthru
      _
    // Predicated region
    $region22: #{tpu_custom_call.1} parent=1 // pred_check
      _
    $region23: #{tpu_custom_call.1} parent=1 // pred_check_branch
      %57 = sbr.rel (0) target = $region25
    $region24: #{tpu_custom_call.1} parent=1 // pred_region
      %s59 = ssub.s32 2048, 2048
      %60 = vsyncadd [#allocation9], %s59
      %s61 = sshll.u32 [#allocation8], 4
      %s62 = int_to_ptr.vmem [resolvable:$true] %s61
      %67 = dma.hbm_to_vmem [thread:$0]  %s5, 2048, %s62, [#allocation9], 128, 128, 8
    $region25: #{tpu_custom_call.1} parent=1 // pred_fallthru
      _
    // Predicated region
    $region26: #{tpu_custom_call.1} parent=1 // pred_check
      _
    $region27: #{tpu_custom_call.1} parent=1 // pred_check_branch
      %69 = sbr.rel (0) target = $region29
    $region28: #{tpu_custom_call.1} parent=1 // pred_region
      _
    $region29: #{tpu_custom_call.1} parent=1 // pred_fallthru
      _
    // Predicated region
    $region30: #{tpu_custom_call.1} parent=1 // pred_check
      _
    $region31: #{tpu_custom_call.1} parent=1 // pred_check_branch
      %71 = sbr.rel (0) target = $region33
    $region32: #{tpu_custom_call.1} parent=1 // pred_region
      %72 = dma.done [#allocation3], 512
    $region33: #{tpu_custom_call.1} parent=1 // pred_fallthru
      _
    // Predicated region
    $region34: #{tpu_custom_call.1} parent=1 // pred_check
      _
    $region35: #{tpu_custom_call.1} parent=1 // pred_check_branch
      %74 = sbr.rel (0) target = $region37
    $region36: #{tpu_custom_call.1} parent=1 // pred_region
      %75 = dma.done [#allocation6], 2048
    $region37: #{tpu_custom_call.1} parent=1 // pred_fallthru
      _
    // Predicated region
    $region38: #{tpu_custom_call.1} parent=1 // pred_check
      _
    $region39: #{tpu_custom_call.1} parent=1 // pred_check_branch
      %77 = sbr.rel (0) target = $region41
    $region40: #{tpu_custom_call.1} parent=1 // pred_region
      %78 = dma.done [#allocation6], 2048
    $region41: #{tpu_custom_call.1} parent=1 // pred_fallthru
      _
    // Predicated region
    $region42: #{tpu_custom_call.1} parent=1 // pred_check
      _
    $region43: #{tpu_custom_call.1} parent=1 // pred_check_branch
      %80 = sbr.rel (0) target = $region45
    $region44: #{tpu_custom_call.1} parent=1 // pred_region
      %81 = dma.done [#allocation9], 2048
    $region45: #{tpu_custom_call.1} parent=1 // pred_fallthru
      _
    %v82 = vld [vmem:[#allocation2] sm:$0xff]
    %v83 = vld [vmem:[#allocation2 + $0x8] sm:$0xff]
    %v84 = vld [vmem:[#allocation2 + $0x10] sm:$0xff]
    %v85 = vld [vmem:[#allocation2 + $0x18] sm:$0xff]
    %v86 = vld [vmem:[#allocation5] sm:$0xff]
    %v87 = vld [vmem:[#allocation5 + $0x8] sm:$0xff]
    %v88 = vld [vmem:[#allocation5 + $0x10] sm:$0xff]
    %v89 = vld [vmem:[#allocation5 + $0x18] sm:$0xff]
    %v90 = vld [vmem:[#allocation5 + $0x20] sm:$0xff]
    %v91 = vld [vmem:[#allocation5 + $0x28] sm:$0xff]
    %v92 = vld [vmem:[#allocation5 + $0x30] sm:$0xff]
    %v93 = vld [vmem:[#allocation5 + $0x38] sm:$0xff]
    %v94 = vld [vmem:[#allocation5 + $0x40] sm:$0xff]
    %v95 = vld [vmem:[#allocation5 + $0x48] sm:$0xff]
    %v96 = vld [vmem:[#allocation5 + $0x50] sm:$0xff]
    %v97 = vld [vmem:[#allocation5 + $0x58] sm:$0xff]
    %v98 = vld [vmem:[#allocation5 + $0x60] sm:$0xff]
    %v99 = vld [vmem:[#allocation5 + $0x68] sm:$0xff]
    %v100 = vld [vmem:[#allocation5 + $0x70] sm:$0xff]
    %v101 = vld [vmem:[#allocation5 + $0x78] sm:$0xff]
    %v102 = vld [vmem:[%s2] sm:$0x1]
    %v104 = vlaneseq
    %v105 = vshrl.u32 %v104, 7
    %v106 = vsub.s32 0, %v105
    %v107 = vrot.slane %v102, %v106
    %109 = vmatprep.subr.mxu0 0.0
    %110 = vmatpush1.msra.mxu0 %v101
    %111 = vmatprep.subr.mxu0 0.0
    %112 = vmatpush1.msra.mxu0 %v100
    %113 = vmatprep.subr.mxu0 0.0
    %114 = vmatpush1.msra.mxu0 %v99
    %115 = vmatprep.subr.mxu0 0.0
    %116 = vmatpush1.msra.mxu0 %v98
    %117 = vmatprep.subr.mxu0 0.0
    %118 = vmatpush1.msra.mxu0 %v97
    %119 = vmatprep.subr.mxu0 0.0
    %120 = vmatpush1.msra.mxu0 %v96
    %121 = vmatprep.subr.mxu0 0.0
    %122 = vmatpush1.msra.mxu0 %v95
    %123 = vmatprep.subr.mxu0 0.0
    %124 = vmatpush1.msra.mxu0 %v94
    %125 = vmatprep.subr.mxu0 0.0
    %126 = vmatpush1.msra.mxu0 %v93
    %127 = vmatprep.subr.mxu0 0.0
    %128 = vmatpush1.msra.mxu0 %v92
    %129 = vmatprep.subr.mxu0 0.0
    %130 = vmatpush1.msra.mxu0 %v91
    %131 = vmatprep.subr.mxu0 0.0
    %132 = vmatpush1.msra.mxu0 %v90
    %133 = vmatprep.subr.mxu0 0.0
    %134 = vmatpush1.msra.mxu0 %v89
    %135 = vmatprep.subr.mxu0 0.0
    %136 = vmatpush1.msra.mxu0 %v88
    %137 = vmatprep.subr.mxu0 0.0
    %138 = vmatpush1.msra.mxu0 %v87
    %139 = vmatprep.subr.mxu0 0.0
    %140 = vmatpush1.msra.mxu0 %v86
    %141 = vmatprep.subr.mxu0 0.0
    %142 = vmatpush2.msra.mxu0 0.0
    %143 = vmatprep.subr.mxu0 0.0
    %144 = vmatpush2.msra.mxu0 0.0
    %145 = vmatprep.subr.mxu0 0.0
    %146 = vmatpush2.msra.mxu0 0.0
    %147 = vmatprep.subr.mxu0 0.0
    %148 = vmatpush2.msra.mxu0 0.0
    %149 = vmatprep.subr.mxu0 0.0
    %150 = vmatpush2.msra.mxu0 0.0
    %151 = vmatprep.subr.mxu0 0.0
    %152 = vmatpush2.msra.mxu0 0.0
    %153 = vmatprep.subr.mxu0 0.0
    %154 = vmatpush2.msra.mxu0 0.0
    %155 = vmatprep.subr.mxu0 0.0
    %156 = vmatpush2.msra.mxu0 0.0
    %157 = vmatprep.subr.mxu0 0.0
    %158 = vmatpush2.msra.mxu0 0.0
    %159 = vmatprep.subr.mxu0 0.0
    %160 = vmatpush2.msra.mxu0 0.0
    %161 = vmatprep.subr.mxu0 0.0
    %162 = vmatpush2.msra.mxu0 0.0
    %163 = vmatprep.subr.mxu0 0.0
    %164 = vmatpush2.msra.mxu0 0.0
    %165 = vmatprep.subr.mxu0 0.0
    %166 = vmatpush2.msra.mxu0 0.0
    %167 = vmatprep.subr.mxu0 0.0
    %168 = vmatpush2.msra.mxu0 0.0
    %169 = vmatprep.subr.mxu0 0.0
    %170 = vmatpush2.msra.mxu0 0.0
    %171 = vmatprep.subr.mxu0 0.0
    %172 = vmatpush2.msra.mxu0 0.0
    %173 = vmatprep.mubr.f32.mxu0 0.0
    %174 = vmatmul.mubr.f32.gmra.mxu0 %v82
    %v175 = vpop.f32.mrf.mxu0
    %v176 = vadd.f32 %v107, %v175
    %v177 = vpop.f32.mrf.mxu0
    %178 = vmatprep.mubr.f32.mxu0 0.0
    %179 = vmatmul.mubr.f32.gmra.mxu0 %v83
    %v180 = vpop.f32.mrf.mxu0
    %v181 = vadd.f32 %v107, %v180
    %v182 = vpop.f32.mrf.mxu0
    %183 = vmatprep.mubr.f32.mxu0 0.0
    %184 = vmatmul.mubr.f32.gmra.mxu0 %v84
    %v185 = vpop.f32.mrf.mxu0
    %v186 = vadd.f32 %v107, %v185
    %v187 = vpop.f32.mrf.mxu0
    %188 = vmatprep.mubr.f32.mxu0 0.0
    %189 = vmatmul.mubr.f32.gmra.mxu0 %v85
    %v190 = vpop.f32.mrf.mxu0
    %v191 = vadd.f32 %v107, %v190
    %v192 = vpop.f32.mrf.mxu0
    %193 = vdwg.mxu0
    %v194 = vmax.f32 %v176, 0.0
    %v195 = vmax.f32 %v181, 0.0
    %v196 = vmax.f32 %v186, 0.0
    %v197 = vmax.f32 %v191, 0.0
    %v198 = vld [vmem:[#allocation7] sm:$0xff]
    %v199 = vld [vmem:[#allocation7 + $0x8] sm:$0xff]
    %v200 = vld [vmem:[#allocation7 + $0x10] sm:$0xff]
    %v201 = vld [vmem:[#allocation7 + $0x18] sm:$0xff]
    %v202 = vld [vmem:[#allocation7 + $0x20] sm:$0xff]
    %v203 = vld [vmem:[#allocation7 + $0x28] sm:$0xff]
    %v204 = vld [vmem:[#allocation7 + $0x30] sm:$0xff]
    %v205 = vld [vmem:[#allocation7 + $0x38] sm:$0xff]
    %v206 = vld [vmem:[#allocation7 + $0x40] sm:$0xff]
    %v207 = vld [vmem:[#allocation7 + $0x48] sm:$0xff]
    %v208 = vld [vmem:[#allocation7 + $0x50] sm:$0xff]
    %v209 = vld [vmem:[#allocation7 + $0x58] sm:$0xff]
    %v210 = vld [vmem:[#allocation7 + $0x60] sm:$0xff]
    %v211 = vld [vmem:[#allocation7 + $0x68] sm:$0xff]
    %v212 = vld [vmem:[#allocation7 + $0x70] sm:$0xff]
    %v213 = vld [vmem:[#allocation7 + $0x78] sm:$0xff]
    %v214 = vld [vmem:[%s4] sm:$0x1]
    %v216 = vlaneseq
    %v217 = vshrl.u32 %v216, 7
    %v218 = vsub.s32 0, %v217
    %v219 = vrot.slane %v214, %v218
    %221 = vmatprep.subr.mxu0 0.0
    %222 = vmatpush1.msra.mxu0 %v213
    %223 = vmatprep.subr.mxu0 0.0
    %224 = vmatpush1.msra.mxu0 %v212
    %225 = vmatprep.subr.mxu0 0.0
    %226 = vmatpush1.msra.mxu0 %v211
    %227 = vmatprep.subr.mxu0 0.0
    %228 = vmatpush1.msra.mxu0 %v210
    %229 = vmatprep.subr.mxu0 0.0
    %230 = vmatpush1.msra.mxu0 %v209
    %231 = vmatprep.subr.mxu0 0.0
    %232 = vmatpush1.msra.mxu0 %v208
    %233 = vmatprep.subr.mxu0 0.0
    %234 = vmatpush1.msra.mxu0 %v207
    %235 = vmatprep.subr.mxu0 0.0
    %236 = vmatpush1.msra.mxu0 %v206
    %237 = vmatprep.subr.mxu0 0.0
    %238 = vmatpush1.msra.mxu0 %v205
    %239 = vmatprep.subr.mxu0 0.0
    %240 = vmatpush1.msra.mxu0 %v204
    %241 = vmatprep.subr.mxu0 0.0
    %242 = vmatpush1.msra.mxu0 %v203
    %243 = vmatprep.subr.mxu0 0.0
    %244 = vmatpush1.msra.mxu0 %v202
    %245 = vmatprep.subr.mxu0 0.0
    %246 = vmatpush1.msra.mxu0 %v201
    %247 = vmatprep.subr.mxu0 0.0
    %248 = vmatpush1.msra.mxu0 %v200
    %249 = vmatprep.subr.mxu0 0.0
    %250 = vmatpush1.msra.mxu0 %v199
    %251 = vmatprep.subr.mxu0 0.0
    %252 = vmatpush1.msra.mxu0 %v198
    %253 = vmatprep.subr.mxu0 0.0
    %254 = vmatpush2.msra.mxu0 0.0
    %255 = vmatprep.subr.mxu0 0.0
    %256 = vmatpush2.msra.mxu0 0.0
    %257 = vmatprep.subr.mxu0 0.0
    %258 = vmatpush2.msra.mxu0 0.0
    %259 = vmatprep.subr.mxu0 0.0
    %260 = vmatpush2.msra.mxu0 0.0
    %261 = vmatprep.subr.mxu0 0.0
    %262 = vmatpush2.msra.mxu0 0.0
    %263 = vmatprep.subr.mxu0 0.0
    %264 = vmatpush2.msra.mxu0 0.0
    %265 = vmatprep.subr.mxu0 0.0
    %266 = vmatpush2.msra.mxu0 0.0
    %267 = vmatprep.subr.mxu0 0.0
    %268 = vmatpush2.msra.mxu0 0.0
    %269 = vmatprep.subr.mxu0 0.0
    %270 = vmatpush2.msra.mxu0 0.0
    %271 = vmatprep.subr.mxu0 0.0
    %272 = vmatpush2.msra.mxu0 0.0
    %273 = vmatprep.subr.mxu0 0.0
    %274 = vmatpush2.msra.mxu0 0.0
    %275 = vmatprep.subr.mxu0 0.0
    %276 = vmatpush2.msra.mxu0 0.0
    %277 = vmatprep.subr.mxu0 0.0
    %278 = vmatpush2.msra.mxu0 0.0
    %279 = vmatprep.subr.mxu0 0.0
    %280 = vmatpush2.msra.mxu0 0.0
    %281 = vmatprep.subr.mxu0 0.0
    %282 = vmatpush2.msra.mxu0 0.0
    %283 = vmatprep.subr.mxu0 0.0
    %284 = vmatpush2.msra.mxu0 0.0
    %285 = vmatprep.mubr.f32.mxu0 0.0
    %286 = vmatmul.mubr.f32.gmra.mxu0 %v194
    %v287 = vpop.f32.mrf.mxu0
    %v288 = vadd.f32 %v219, %v287
    %v289 = vpop.f32.mrf.mxu0
    %290 = vmatprep.mubr.f32.mxu0 0.0
    %291 = vmatmul.mubr.f32.gmra.mxu0 %v195
    %v292 = vpop.f32.mrf.mxu0
    %v293 = vadd.f32 %v219, %v292
    %v294 = vpop.f32.mrf.mxu0
    %295 = vmatprep.mubr.f32.mxu0 0.0
    %296 = vmatmul.mubr.f32.gmra.mxu0 %v196
    %v297 = vpop.f32.mrf.mxu0
    %v298 = vadd.f32 %v219, %v297
    %v299 = vpop.f32.mrf.mxu0
    %300 = vmatprep.mubr.f32.mxu0 0.0
    %301 = vmatmul.mubr.f32.gmra.mxu0 %v197
    %v302 = vpop.f32.mrf.mxu0
    %v303 = vadd.f32 %v219, %v302
    %v304 = vpop.f32.mrf.mxu0
    %305 = vdwg.mxu0
    %v306 = vmax.f32 %v288, 0.0
    %v307 = vmax.f32 %v293, 0.0
    %v308 = vmax.f32 %v298, 0.0
    %v309 = vmax.f32 %v303, 0.0
    %v310 = vld [vmem:[#allocation8] sm:$0xff]
    %v311 = vld [vmem:[#allocation8 + $0x8] sm:$0xff]
    %v312 = vld [vmem:[#allocation8 + $0x10] sm:$0xff]
    %v313 = vld [vmem:[#allocation8 + $0x18] sm:$0xff]
    %v314 = vld [vmem:[#allocation8 + $0x20] sm:$0xff]
    %v315 = vld [vmem:[#allocation8 + $0x28] sm:$0xff]
    %v316 = vld [vmem:[#allocation8 + $0x30] sm:$0xff]
    %v317 = vld [vmem:[#allocation8 + $0x38] sm:$0xff]
    %v318 = vld [vmem:[#allocation8 + $0x40] sm:$0xff]
    %v319 = vld [vmem:[#allocation8 + $0x48] sm:$0xff]
    %v320 = vld [vmem:[#allocation8 + $0x50] sm:$0xff]
    %v321 = vld [vmem:[#allocation8 + $0x58] sm:$0xff]
    %v322 = vld [vmem:[#allocation8 + $0x60] sm:$0xff]
    %v323 = vld [vmem:[#allocation8 + $0x68] sm:$0xff]
    %v324 = vld [vmem:[#allocation8 + $0x70] sm:$0xff]
    %v325 = vld [vmem:[#allocation8 + $0x78] sm:$0xff]
    %v326 = vld [vmem:[%s6] sm:$0x1]
    %v328 = vlaneseq
    %v329 = vshrl.u32 %v328, 7
    %v330 = vsub.s32 0, %v329
    %v331 = vrot.slane %v326, %v330
    %333 = vmatprep.subr.mxu0 0.0
    %334 = vmatpush1.msra.mxu0 %v325
    %335 = vmatprep.subr.mxu0 0.0
    %336 = vmatpush1.msra.mxu0 %v324
    %337 = vmatprep.subr.mxu0 0.0
    %338 = vmatpush1.msra.mxu0 %v323
    %339 = vmatprep.subr.mxu0 0.0
    %340 = vmatpush1.msra.mxu0 %v322
    %341 = vmatprep.subr.mxu0 0.0
    %342 = vmatpush1.msra.mxu0 %v321
    %343 = vmatprep.subr.mxu0 0.0
    %344 = vmatpush1.msra.mxu0 %v320
    %345 = vmatprep.subr.mxu0 0.0
    %346 = vmatpush1.msra.mxu0 %v319
    %347 = vmatprep.subr.mxu0 0.0
    %348 = vmatpush1.msra.mxu0 %v318
    %349 = vmatprep.subr.mxu0 0.0
    %350 = vmatpush1.msra.mxu0 %v317
    %351 = vmatprep.subr.mxu0 0.0
    %352 = vmatpush1.msra.mxu0 %v316
    %353 = vmatprep.subr.mxu0 0.0
    %354 = vmatpush1.msra.mxu0 %v315
    %355 = vmatprep.subr.mxu0 0.0
    %356 = vmatpush1.msra.mxu0 %v314
    %357 = vmatprep.subr.mxu0 0.0
    %358 = vmatpush1.msra.mxu0 %v313
    %359 = vmatprep.subr.mxu0 0.0
    %360 = vmatpush1.msra.mxu0 %v312
    %361 = vmatprep.subr.mxu0 0.0
    %362 = vmatpush1.msra.mxu0 %v311
    %363 = vmatprep.subr.mxu0 0.0
    %364 = vmatpush1.msra.mxu0 %v310
    %365 = vmatprep.subr.mxu0 0.0
    %366 = vmatpush2.msra.mxu0 0.0
    %367 = vmatprep.subr.mxu0 0.0
    %368 = vmatpush2.msra.mxu0 0.0
    %369 = vmatprep.subr.mxu0 0.0
    %370 = vmatpush2.msra.mxu0 0.0
    %371 = vmatprep.subr.mxu0 0.0
    %372 = vmatpush2.msra.mxu0 0.0
    %373 = vmatprep.subr.mxu0 0.0
    %374 = vmatpush2.msra.mxu0 0.0
    %375 = vmatprep.subr.mxu0 0.0
    %376 = vmatpush2.msra.mxu0 0.0
    %377 = vmatprep.subr.mxu0 0.0
    %378 = vmatpush2.msra.mxu0 0.0
    %379 = vmatprep.subr.mxu0 0.0
    %380 = vmatpush2.msra.mxu0 0.0
    %381 = vmatprep.subr.mxu0 0.0
    %382 = vmatpush2.msra.mxu0 0.0
    %383 = vmatprep.subr.mxu0 0.0
    %384 = vmatpush2.msra.mxu0 0.0
    %385 = vmatprep.subr.mxu0 0.0
    %386 = vmatpush2.msra.mxu0 0.0
    %387 = vmatprep.subr.mxu0 0.0
    %388 = vmatpush2.msra.mxu0 0.0
    %389 = vmatprep.subr.mxu0 0.0
    %390 = vmatpush2.msra.mxu0 0.0
    %391 = vmatprep.subr.mxu0 0.0
    %392 = vmatpush2.msra.mxu0 0.0
    %393 = vmatprep.subr.mxu0 0.0
    %394 = vmatpush2.msra.mxu0 0.0
    %395 = vmatprep.subr.mxu0 0.0
    %396 = vmatpush2.msra.mxu0 0.0
    %397 = vmatprep.mubr.f32.mxu0 0.0
    %398 = vmatmul.mubr.f32.gmra.mxu0 %v306
    %v399 = vpop.f32.mrf.mxu0
    %v400 = vadd.f32 %v331, %v399
    %v401 = vpop.f32.mrf.mxu0
    %402 = vmatprep.mubr.f32.mxu0 0.0
    %403 = vmatmul.mubr.f32.gmra.mxu0 %v307
    %v404 = vpop.f32.mrf.mxu0
    %v405 = vadd.f32 %v331, %v404
    %v406 = vpop.f32.mrf.mxu0
    %407 = vmatprep.mubr.f32.mxu0 0.0
    %408 = vmatmul.mubr.f32.gmra.mxu0 %v308
    %v409 = vpop.f32.mrf.mxu0
    %v410 = vadd.f32 %v331, %v409
    %v411 = vpop.f32.mrf.mxu0
    %412 = vmatprep.mubr.f32.mxu0 0.0
    %413 = vmatmul.mubr.f32.gmra.mxu0 %v309
    %v414 = vpop.f32.mrf.mxu0
    %v415 = vadd.f32 %v331, %v414
    %v416 = vpop.f32.mrf.mxu0
    %417 = vdwg.mxu0
    %418 = vst [vmem:[#allocation10] sm:$0xff] %v400
    %419 = vst [vmem:[#allocation10 + $0x8] sm:$0xff] %v405
    %420 = vst [vmem:[#allocation10 + $0x10] sm:$0xff] %v410
    %421 = vst [vmem:[#allocation10 + $0x18] sm:$0xff] %v415
    // Predicated region
    $region46: #{tpu_custom_call.1} parent=1 // pred_check
      _
    $region47: #{tpu_custom_call.1} parent=1 // pred_check_branch
      %423 = sbr.rel (0) target = $region49
    $region48: #{tpu_custom_call.1} parent=1 // pred_region
      %s425 = ssub.s32 512, 512
      %426 = vsyncadd [#allocation4], %s425
      %s427 = sshll.u32 [#allocation10], 4
      %s428 = int_to_ptr.vmem [resolvable:$true] %s427
      %433 = dma.vmem_to_hbm [thread:$0]  %s428, 512, %s7, [#allocation4], 128, 128, 8
    $region49: #{tpu_custom_call.1} parent=1 // pred_fallthru
      _
    // Predicated region
    $region50: #{tpu_custom_call.1} parent=1 // pred_check
      _
    $region51: #{tpu_custom_call.1} parent=1 // pred_check_branch
      %435 = sbr.rel (0) target = $region53
    $region52: #{tpu_custom_call.1} parent=1 // pred_region
      %436 = dma.done [#allocation4], 512
    $region53: #{tpu_custom_call.1} parent=1 // pred_fallthru
      _
    %437 = vsyncpa [#allocation3], 1
    %438 = vsyncpa [#allocation6], 1
    %439 = vsyncpa [#allocation9], 1
    %440 = vsyncpa [#allocation4], 1

</llo_original>
